<compile_context>
chip_gen: v5e
topology: v5e:2x2
jax: 0.10.0
libtpu: 0.0.40
codegen_flags: <defaults>
</compile_context>

<pallas_src>
import functools
import math

import jax
import jax.numpy as jnp
from jax.experimental import pallas as pl
from jax.experimental.pallas import tpu as pltpu

_LANE = 128
_SUBLANE = 8
_MAX_LANE_TILE = 2048
_MAX_SUBLANE_TILE = 1024


# --------------------------------------------------------------------------
# helpers
# --------------------------------------------------------------------------
def _ceil_to(a, m):
    return ((a + m - 1) // m) * m


def _pick_lane_tile(n):
    """Lane-axis tile: a multiple of 128 or the full dimension."""
    if n <= _LANE:
        return n
    if n % _LANE == 0:
        return min(n, _MAX_LANE_TILE)
    if n <= _MAX_LANE_TILE:
        return n  # full extent is always a legal block size
    return _MAX_LANE_TILE  # ragged last tile masked in-kernel


def _vmem_capacity_bytes():
    try:
        info = pltpu.get_tpu_info()
        cap = getattr(info, "vmem_capacity_bytes", None)
        if cap:
            return int(cap)
    except Exception:
        pass
    return 64 * 1024 * 1024  # conservative fallback (v7x-sized)


def _vmem_limit(need_bytes, vmem_cap):
    need = int(need_bytes) + (1 << 20)  # slack
    return int(min(max(2 * need, 32 * 1024 * 1024), vmem_cap))


# --------------------------------------------------------------------------
# kernels
# --------------------------------------------------------------------------
def _mean_mid_single_kernel(x_ref, o_ref, *, inv_r):
    """Whole reduction axis present in the block: (tile_pre, R, tile_n)."""
    x = x_ref[...].astype(jnp.float32)
    o_ref[...] = (jnp.sum(x, axis=-2, keepdims=True) * inv_r).astype(o_ref.dtype)


def _mean_mid_acc_kernel(x_ref, o_ref, acc_ref, *, r_total, tile_r):
    """Reduce the middle (sublane) axis of (pre, R, post); R tiled over grid."""
    k = pl.program_id(2)
    last = pl.num_programs(2) - 1

    @pl.when(k == 0)
    def _init():
        acc_ref[...] = jnp.zeros_like(acc_ref)

    def accumulate(x):
        # x: (tile_r, tile_n) f32, tile_r % 8 == 0. Splitting the sublane axis
        # at 8-row vreg boundaries is layout-free; the sum over the leading
        # chunk axis is pure VPU adds into a sublane-dense (8, tile_n) acc.
        acc_ref[...] += jnp.sum(x.reshape(tile_r // _SUBLANE, _SUBLANE, x.shape[-1]),
                                axis=0)

    if r_total % tile_r != 0:
        # Pay the ragged-R mask only on the final reduction step.
        @pl.when(k != last)
        def _bulk():
            accumulate(x_ref[...].astype(jnp.float32))

        @pl.when(k == last)
        def _tail():
            x = x_ref[...].astype(jnp.float32)
            row = jax.lax.broadcasted_iota(jnp.int32, x.shape, 0)
            accumulate(jnp.where(row + k * tile_r < r_total, x, 0.0))
    else:
        accumulate(x_ref[...].astype(jnp.float32))

    @pl.when(k == last)
    def _finalize():
        total = jnp.sum(acc_ref[...], axis=0, keepdims=True)  # one 8->1 reduce
        o_ref[...] = (total * (1.0 / r_total)).astype(o_ref.dtype)


def _mean_last_single_kernel(x_ref, o_ref, *, inv_r):
    """Whole reduction axis present in the block: (tile_p, R)."""
    x = x_ref[...].astype(jnp.float32)
    o_ref[...] = (jnp.sum(x, axis=1, keepdims=True) * inv_r).astype(o_ref.dtype)


def _mean_last_acc_kernel(x_ref, o_ref, acc_ref, *, r_total, tile_rl):
    """Reduce the trailing (lane) axis of (pre, R); R tiled over grid."""
    k = pl.program_id(1)
    last = pl.num_programs(1) - 1

    @pl.when(k == 0)
    def _init():
        acc_ref[...] = jnp.zeros_like(acc_ref)

    def accumulate(x):
        # x: (tile_p, tile_rl) f32, tile_rl % 128 == 0. Static 128-lane slices
        # are whole-vreg selects; adds are pure VPU work into a lane-dense
        # (tile_p, 128) acc. The single cross-lane (XLU) reduce is deferred
        # to the finalize step.
        part = x[:, 0:_LANE]
        for c in range(1, tile_rl // _LANE):
            part = part + x[:, c * _LANE:(c + 1) * _LANE]
        acc_ref[...] += part

    if r_total % tile_rl != 0:
        @pl.when(k != last)
        def _bulk():
            accumulate(x_ref[...].astype(jnp.float32))

        @pl.when(k == last)
        def _tail():
            x = x_ref[...].astype(jnp.float32)
            col = jax.lax.broadcasted_iota(jnp.int32, x.shape, 1)
            accumulate(jnp.where(col + k * tile_rl < r_total, x, 0.0))
    else:
        accumulate(x_ref[...].astype(jnp.float32))

    @pl.when(k == last)
    def _finalize():
        total = jnp.sum(acc_ref[...], axis=1, keepdims=True)  # one XLU reduce
        o_ref[...] = (total * (1.0 / r_total)).astype(o_ref.dtype)


# --------------------------------------------------------------------------
# wrappers
# --------------------------------------------------------------------------
def _mean_mid_axis(x, dim0, R, out_shape_nd, out_dtype, itemsize, budget, vmem_cap):
    shape = x.shape
    pre = math.prod(shape[:dim0])
    post = math.prod(shape[dim0 + 1:])
    x3 = x.reshape(pre, R, post)  # contiguous merge: no HBM transpose/copy

    tile_n = _pick_lane_tile(post)
    n_pad = _ceil_to(tile_n, _LANE)
    max_r_rows = max(1, budget // (n_pad * itemsize))

    if R <= max_r_rows:
        # ---- single reduction block per output tile (no accumulator) -------
        r_pad = _ceil_to(R, _SUBLANE)
        tile_pre = max(1, min(pre, 512, budget // (r_pad * n_pad * itemsize)))
        # v7x: make sure both TensorCores get at least one parallel block.
        if pl.cdiv(pre, tile_pre) * pl.cdiv(post, tile_n) == 1:
            if pre >= 2:
                tile_pre = pl.cdiv(pre, 2)
            elif post > _LANE:
                tile_n = max(_LANE, _LANE * ((tile_n // 2) // _LANE))
        grid = (pl.cdiv(pre, tile_pre), pl.cdiv(post, tile_n))
        n_pad = _ceil_to(tile_n, _LANE)
        in_bytes = tile_pre * r_pad * n_pad * itemsize
        out_bytes = tile_pre * _SUBLANE * n_pad * itemsize
        kernel = functools.partial(_mean_mid_single_kernel, inv_r=1.0 / R)
        out3 = pl.pallas_call(
            kernel,
            out_shape=jax.ShapeDtypeStruct((pre, 1, post), out_dtype),
            grid_spec=pltpu.PrefetchScalarGridSpec(
                num_scalar_prefetch=0,
                grid=grid,
                in_specs=[pl.BlockSpec((tile_pre, R, tile_n),
                                       lambda i, j: (i, 0, j))],
                out_specs=pl.BlockSpec((tile_pre, 1, tile_n),
                                       lambda i, j: (i, 0, j)),
            ),
            compiler_params=pltpu.CompilerParams(
                dimension_semantics=("parallel", "parallel"),
                vmem_limit_bytes=_vmem_limit(2 * in_bytes + 2 * out_bytes, vmem_cap),
            ),
        )(x3)
        return out3.reshape(out_shape_nd)

    # ---- R does not fit one block: accumulate over a trailing grid axis ----
    tile_r = max(_SUBLANE,
                 (min(max_r_rows, _MAX_SUBLANE_TILE) // _SUBLANE) * _SUBLANE)
    if pre * pl.cdiv(post, tile_n) == 1 and post > _LANE:
        tile_n = max(_LANE, _LANE * ((tile_n // 2) // _LANE))  # v7x: 2 TC blocks
    grid = (pre, pl.cdiv(post, tile_n), pl.cdiv(R, tile_r))
    n_pad = _ceil_to(tile_n, _LANE)
    in_bytes = tile_r * n_pad * itemsize
    out_bytes = _SUBLANE * n_pad * itemsize
    acc_bytes = _SUBLANE * n_pad * 4
    kernel = functools.partial(_mean_mid_acc_kernel, r_total=R, tile_r=tile_r)
    out3 = pl.pallas_call(
        kernel,
        out_shape=jax.ShapeDtypeStruct((pre, 1, post), out_dtype),
        grid_spec=pltpu.PrefetchScalarGridSpec(
            num_scalar_prefetch=0,
            grid=grid,
            in_specs=[pl.BlockSpec((None, tile_r, tile_n),
                                   lambda i, j, k: (i, k, j))],
            out_specs=pl.BlockSpec((None, 1, tile_n),
                                   lambda i, j, k: (i, 0, j)),
            scratch_shapes=[pltpu.VMEM((_SUBLANE, tile_n), jnp.float32)],
        ),
        compiler_params=pltpu.CompilerParams(
            dimension_semantics=("parallel", "parallel", "arbitrary"),
            vmem_limit_bytes=_vmem_limit(2 * in_bytes + 2 * out_bytes + acc_bytes,
                                         vmem_cap),
        ),
    )(x3)
    return out3.reshape(out_shape_nd)


def _mean_last_axis(x, R, out_shape_nd, out_dtype, itemsize, budget, vmem_cap):
    pre = math.prod(x.shape[:-1])
    x2 = x.reshape(pre, R)

    tile_p = pre if pre <= 256 else 256
    # v7x: create >=2 parallel blocks when there is enough work to hide the
    # extra grid step (single-TC generations lose <1 us).
    if 9 <= pre <= 256 and pre * R * itemsize >= (1 << 20):
        tile_p = _SUBLANE * pl.cdiv(pl.cdiv(pre, 2), _SUBLANE)
    p_pad = max(_SUBLANE, _ceil_to(tile_p, _SUBLANE))
    max_r_lanes = max(_LANE, budget // (p_pad * itemsize))

    if R <= max_r_lanes and R <= 8192:
        # ---- single reduction block per output tile -------------------------
        in_bytes = p_pad * _ceil_to(R, _LANE) * itemsize
        out_bytes = p_pad * _LANE * itemsize
        kernel = functools.partial(_mean_last_single_kernel, inv_r=1.0 / R)
        out2 = pl.pallas_call(
            kernel,
            out_shape=jax.ShapeDtypeStruct((pre, 1), out_dtype),
            grid_spec=pltpu.PrefetchScalarGridSpec(
                num_scalar_prefetch=0,
                grid=(pl.cdiv(pre, tile_p),),
                in_specs=[pl.BlockSpec((tile_p, R), lambda i: (i, 0))],
                out_specs=pl.BlockSpec((tile_p, 1), lambda i: (i, 0)),
            ),
            compiler_params=pltpu.CompilerParams(
                dimension_semantics=("parallel",),
                vmem_limit_bytes=_vmem_limit(2 * in_bytes + 2 * out_bytes, vmem_cap),
            ),
        )(x2)
        return out2.reshape(out_shape_nd)

    # ---- R too large for one block: lane-chunk accumulation over k ---------
    tile_rl = max(_LANE, _LANE * (min(max_r_lanes, _MAX_LANE_TILE) // _LANE))
    in_bytes = p_pad * tile_rl * itemsize
    out_bytes = p_pad * _LANE * itemsize
    acc_bytes = p_pad * _LANE * 4
    kernel = functools.partial(_mean_last_acc_kernel, r_total=R, tile_rl=tile_rl)
    out2 = pl.pallas_call(
        kernel,
        out_shape=jax.ShapeDtypeStruct((pre, 1), out_dtype),
        grid_spec=pltpu.PrefetchScalarGridSpec(
            num_scalar_prefetch=0,
            grid=(pl.cdiv(pre, tile_p), pl.cdiv(R, tile_rl)),
            in_specs=[pl.BlockSpec((tile_p, tile_rl), lambda i, k: (i, k))],
            out_specs=pl.BlockSpec((tile_p, 1), lambda i, k: (i, 0)),
            scratch_shapes=[pltpu.VMEM((tile_p, _LANE), jnp.float32)],
        ),
        compiler_params=pltpu.CompilerParams(
            dimension_semantics=("parallel", "arbitrary"),
            vmem_limit_bytes=_vmem_limit(2 * in_bytes + 2 * out_bytes + acc_bytes,
                                         vmem_cap),
        ),
    )(x2)
    return out2.reshape(out_shape_nd)


def mean_pallas(x, dim0, *, block_budget_bytes=None):
    """Equivalent of `x.mean(axis=dim0)` (the PyTorch `Mean` module forward)."""
    x = jnp.asarray(x)
    ndim = x.ndim
    if ndim == 0:
        # TODO(synk): PyTorch errors for 0-d mean over a dim; return the value.
        return x
    dim0 = dim0 % ndim
    shape = x.shape
    out_shape_nd = shape[:dim0] + shape[dim0 + 1:]
    R = shape[dim0]

    # dtype handling; PyTorch raises on integer/bool mean -> promote to f32.
    if x.dtype == jnp.float64:
        x = x.astype(jnp.float32)
    if jnp.issubdtype(x.dtype, jnp.floating):
        out_dtype = x.dtype
    else:
        out_dtype = jnp.float32
        if x.dtype == jnp.bool_:
            x = x.astype(jnp.float32)

    if R == 0:
        return jnp.full(out_shape_nd, jnp.nan, dtype=out_dtype)
    if math.prod(out_shape_nd) == 0:
        return jnp.zeros(out_shape_nd, dtype=out_dtype)

    itemsize = x.dtype.itemsize
    cap = _vmem_capacity_bytes()
    if block_budget_bytes is not None:
        budget = int(block_budget_bytes)          # test hook
        vmem_cap = 56 * 1024 * 1024
    elif cap >= 120 * 1024 * 1024:                # v5e / v6e: 128 MiB VMEM
        budget = 16 * 1024 * 1024
        vmem_cap = 100 * 1024 * 1024
    else:                                         # v7x: 64 MiB VMEM
        budget = 8 * 1024 * 1024
        vmem_cap = 56 * 1024 * 1024

    if dim0 == ndim - 1:
        return _mean_last_axis(x, R, out_shape_nd, out_dtype, itemsize,
                               budget, vmem_cap)
    return _mean_mid_axis(x, dim0, R, out_shape_nd, out_dtype, itemsize,
                          budget, vmem_cap)


# --------------------------------------------------------------------------
# self-test
# --------------------------------------------------------------------------
if __name__ == "__main__":
    keys = jax.random.split(jax.random.PRNGKey(0), 4)

    # Canonical module usage: (B, C, H, W) = (2, 4, 16, 16), mean over channels.
    x = jax.random.normal(keys[0], (2, 4, 16, 16), dtype=jnp.float32)
    y = jax.block_until_ready(mean_pallas(x, 1))
    assert y.shape == (2, 16, 16), y.shape
    assert jnp.allclose(y, jnp.mean(x, axis=1), atol=1e-5, rtol=1e-5), "mid-axis"

    # Mean over the batch axis (dim0 = 0).
    y0 = jax.block_until_ready(mean_pallas(x, 0))
    assert jnp.allclose(y0, jnp.mean(x, axis=0), atol=1e-5, rtol=1e-5), "dim0=0"

    # Trailing-axis reduction (single-block lane-reduce path).
    x3 = jax.random.normal(keys[1], (2, 3, 300), dtype=jnp.float32)
    y3 = jax.block_until_ready(mean_pallas(x3, 2))
    assert jnp.allclose(y3, jnp.mean(x3, axis=2), atol=1e-5, rtol=1e-5), "last-axis"

    # Force the accumulator mid-axis path (ragged final R tile, masked once).
    x2 = jax.random.normal(keys[2], (2, 20, 176), dtype=jnp.float32)
    y2 = jax.block_until_ready(mean_pallas(x2, 1, block_budget_bytes=16 * 1024))
    assert jnp.allclose(y2, jnp.mean(x2, axis=1), atol=1e-5, rtol=1e-5), \
        "ragged mid-axis accumulator"

    # Force the lane-chunk accumulator last-axis path (ragged final R tile).
    y4 = jax.block_until_ready(mean_pallas(x3, 2, block_budget_bytes=4 * 1024))
    assert jnp.allclose(y4, jnp.mean(x3, axis=2), atol=1e-5, rtol=1e-5), \
        "ragged last-axis accumulator"

    # bfloat16 input: f32 accumulation, bf16 output.
    xb = jax.random.normal(keys[3], (2, 8, 32), dtype=jnp.bfloat16)
    yb = jax.block_until_ready(mean_pallas(xb, 1))
    assert jnp.allclose(yb.astype(jnp.float32),
                        jnp.mean(xb.astype(jnp.float32), axis=1),
                        atol=1e-2, rtol=1e-2), "bf16"

    print("KERNEL_OK")
</pallas_src>

<mosaic_0001>
module attributes {stable_mosaic.version = 11 : i64} {
  func.func @_mean_mid_single_kernel(%arg0: i32, %arg1: i32, %arg2: memref<1x4x256xf32, #tpu.memory_space<vmem>>, %arg3: memref<1x1x256xf32, #tpu.memory_space<vmem>>) attributes {dimension_semantics = [#tpu.dimension_semantics<parallel>, #tpu.dimension_semantics<parallel>], iteration_bounds = array<i64: 2, 1>, scalar_prefetch = 0 : i64, scratch_operands = 0 : i64, tpu.core_type = #tpu.core_type<tc>, window_params = [{transform_indices = @transform_0, window_bounds = array<i64: 1, 4, 256>}, {transform_indices = @transform_1, window_bounds = array<i64: 1, 1, 256>}]} {
    %c0 = arith.constant 0 : index
    %c0_0 = arith.constant 0 : index
    %c0_1 = arith.constant 0 : index
    %0 = vector.load %arg2[%c0, %c0_0, %c0_1] : memref<1x4x256xf32, #tpu.memory_space<vmem>>, vector<1x4x256xf32>
    %cst = arith.constant dense<0.000000e+00> : vector<1x256xf32>
    %1 = vector.multi_reduction <add>, %0, %cst [1] : vector<1x4x256xf32> to vector<1x256xf32>
    %2 = vector.shape_cast %1 : vector<1x256xf32> to vector<1x1x256xf32>
    %cst_2 = arith.constant 2.500000e-01 : f32
    %3 = vector.broadcast %cst_2 : f32 to vector<1x1x256xf32>
    %4 = arith.mulf %2, %3 : vector<1x1x256xf32>
    %c0_3 = arith.constant 0 : index
    %c0_4 = arith.constant 0 : index
    %c0_5 = arith.constant 0 : index
    %5 = vector.load %arg3[%c0_3, %c0_4, %c0_5] : memref<1x1x256xf32, #tpu.memory_space<vmem>>, vector<1x1x256xf32>
    tpu.vector_store %arg3[%c0_3, %c0_4, %c0_5], %4 {strides = array<i32>} : memref<1x1x256xf32, #tpu.memory_space<vmem>>, vector<1x1x256xf32>,
    return
  }
  func.func @transform_0(%arg0: i32, %arg1: i32) -> (i32, i32, i32) {
    %c0_i32 = arith.constant 0 : i32
    %c0_i32_0 = arith.constant 0 : i32
    return %arg0, %c0_i32, %arg1 : i32, i32, i32
  }
  func.func @transform_1(%arg0: i32, %arg1: i32) -> (i32, i32, i32) {
    %c0_i32 = arith.constant 0 : i32
    %c0_i32_0 = arith.constant 0 : i32
    return %arg0, %c0_i32, %arg1 : i32, i32, i32
  }
}

</mosaic_0001>

<llo_original>
// kernel: tpu_custom_call.1
$region0: #{tpu_custom_call.1}
  #allocation0 [shape = 'u32[]', space=smem, size = 0x4, offset = 0x4, fixed_abs, tag = 'smem constant byte address 0x4 - core index']
  #allocation1 [shape = 'u32[72,128]{1,0:T(1,128)}', space=vmem, size = 0x9000, scoped, tag = 'internal scratch']
  %s0 = inlined_call_operand.hbm [shape: f32[2,4,256], index: 0, kind: input, shape index: {}]
  %s1 = inlined_call_operand.hbm [shape: f32[2,1,256], index: 1, kind: output, shape index: {}]
  %s2 = sld [smem:[#allocation0]]
  $region41: #{tpu_custom_call.1} parent=0
    _
  %s4 = ssub.s32 1, %s2
  %s5 = scalar_select 0, %s4, %s2
  $region1: #{tpu_custom_call.1} parent=0
    #allocation2 [shape = 'u8[8192]{0}', space=vmem, size = 0x2000, scoped, tag = 'input window, operand 0']
    #allocation3 [shape = 's32[2]{0}', space=sflag, size = 0x8, scoped, tag = 'scoped memory for tpu_custom_call.1']
    #allocation4 [shape = 's32[2]{0}', space=sflag, size = 0x8, scoped, tag = 'scoped memory for tpu_custom_call.1']
    #allocation5 [shape = 'u8[2048]{0}', space=vmem, size = 0x800, scoped, tag = 'output window, operand 0']
    %6 = vsyncpa [#allocation3], 0
    %s7 = scalar_lea.sflag [#allocation3], 1
    %8 = vsyncpa %s7, 0
    %9 = vsyncpa [#allocation4], 0
    %s10 = scalar_lea.sflag [#allocation4], 1
    %11 = vsyncpa %s10, 0
    loop: start=0, step=1, limit=4
    $region2: #{tpu_custom_call.1} parent=1 // loop_pre_header
      _
    $region3: #{tpu_custom_call.1} parent=1 // loop_header
      %s13 = sphi 0, %s17
      %p14 = scmp.ge.s32.totalorder %s13, 4
      %s20 = sphi 0, %s32
      %s21 = sphi 0, %s28
      %s22 = sphi 0, %s20
      %s23 = sphi 0, %s21
      %s24 = sphi 0, %s22
      %s25 = sphi 0, %s23
      %s37 = sphi 0, %s39
      %s40 = sphi 0, %s37
      %s41 = sphi 0, %s40
      %s57 = sphi 0, %s41
      %s65 = sphi 0, %s67
      %s68 = sphi 0, %s65
      %s69 = sphi 0, %s68
      %s85 = sphi 0, %s69
    $region4: #{tpu_custom_call.1} parent=1 // loop_header_branch
      %16 = sbr.rel (%p14) target = $region8
    $region5: #{tpu_custom_call.1} parent=1 // loop_body
      %s18 = ssub.s32 %s13, 1
      %s19 = ssub.s32 %s13, 2
      %s26 = sadd.s32 1, %s21
      %p27 = scmp.ge.s32.totalorder %s26, 1
      %s28 = scalar_select %p27, 0, %s26
      %s29 = sadd.s32 1, %s20
      %s30 = scalar_select %p27, %s29, %s20
      %p31 = scmp.ge.s32.totalorder %s30, 2
      %s32 = scalar_select %p31, 0, %s30
      %s33 = ssub.s32 %s20, %s32
      %s34 = ssub.s32 %s21, %s28
      %s35 = sor.u32 %s33, %s34
      %p36 = scmp.eq.s32.totalorder %s35, 0
      %s38 = sadd.s32 %s37, 1
      %s39 = scalar_select %p36, %s37, %s38
      %p42 = pneg %p36
      %p43 = scmp.eq.s32.totalorder %s13, 1
      %p44 = por %p42, %p43
      %p45 = scmp.ne.s32.totalorder %s37, %s40
      %p46 = scmp.eq.s32.totalorder %s13, 0
      %p47 = por %p45, %p46
      %p48 = scmp.ne.s32.totalorder %s37, %s40
      %p49 = scmp.eq.s32.totalorder %s18, 1
      %p50 = por %p48, %p49
      %p51 = scmp.ne.s32.totalorder %s40, %s41
      %p52 = scmp.eq.s32.totalorder %s18, 0
      %p53 = por %p51, %p52
      %p54 = scmp.ne.s32.totalorder %s40, %s41
      %p55 = scmp.eq.s32.totalorder %s19, 1
      %p56 = por %p54, %p55
      %p58 = scmp.ne.s32.totalorder %s41, %s57
      %p59 = scmp.eq.s32.totalorder %s19, 0
      %p60 = por %p58, %p59
      %s61 = ssub.s32 %s20, %s32
      %s62 = ssub.s32 %s21, %s28
      %s63 = sor.u32 %s61, %s62
      %p64 = scmp.eq.s32.totalorder %s63, 0
      %s66 = sadd.s32 %s65, 1
      %s67 = scalar_select %p64, %s65, %s66
      %p70 = pneg %p64
      %p71 = scmp.eq.s32.totalorder %s13, 1
      %p72 = por %p70, %p71
      %p73 = scmp.ne.s32.totalorder %s65, %s68
      %p74 = scmp.eq.s32.totalorder %s13, 0
      %p75 = por %p73, %p74
      %p76 = scmp.ne.s32.totalorder %s65, %s68
      %p77 = scmp.eq.s32.totalorder %s18, 1
      %p78 = por %p76, %p77
      %p79 = scmp.ne.s32.totalorder %s68, %s69
      %p80 = scmp.eq.s32.totalorder %s18, 0
      %p81 = por %p79, %p80
      %p82 = scmp.ne.s32.totalorder %s68, %s69
      %p83 = scmp.eq.s32.totalorder %s19, 1
      %p84 = por %p82, %p83
      %p86 = scmp.ne.s32.totalorder %s69, %s85
      %p87 = scmp.eq.s32.totalorder %s19, 0
      %p88 = por %p86, %p87
      %p89 = scmp.le.s32.totalorder 1, %s13
      %p90 = scmp.lt.s32.totalorder %s13, 3
      %p91 = pnand %p89, %p90
      %p92 = pneg %p91
      // Predicated region
      $region9: #{tpu_custom_call.1} parent=5 // pred_check
        _
      $region10: #{tpu_custom_call.1} parent=5 // pred_check_branch
        %94 = sbr.rel (%p91) target = $region12
      $region11: #{tpu_custom_call.1} parent=5 // pred_region
        %s95 = ssub.s32 %s13, 1
      $region12: #{tpu_custom_call.1} parent=5 // pred_fallthru
        _
      %p96 = scmp.lt.s32.totalorder %s13, 2
      // Predicated region
      $region13: #{tpu_custom_call.1} parent=5 // pred_check
        %p97 = pneg %p96
      $region14: #{tpu_custom_call.1} parent=5 // pred_check_branch
        %99 = sbr.rel (%p97) target = $region16
      $region15: #{tpu_custom_call.1} parent=5 // pred_region
        // Predicated region
        $region17: #{tpu_custom_call.1} parent=15 // pred_check
          %p100 = pneg %p47
        $region18: #{tpu_custom_call.1} parent=15 // pred_check_branch
          %102 = sbr.rel (%p100) target = $region20
        $region19: #{tpu_custom_call.1} parent=15 // pred_region
          %s103 = sand.u32 %s37, 1
          %s104 = scalar_lea.sflag [#allocation3], %s103
          %s105 = sand.u32 %s37, 1
          %s106 = smul.addr %s105, 8
          %s107 = scalar_lea.vmem [#allocation2], %s106
          %s108 = smul.u32 2, %s21
          %110 = vsyncadd %s104, 0
          %s111 = smul.addr %s20, 2
          %s112 = sadd.s32 %s108, %s111
          %s113 = smul.addr %s112, 4
          %s114 = scalar_lea.hbm %s0, %s113
          %s116 = sshll.u32 %s114, 4
          %s117 = int_to_ptr.hbm [resolvable:$true] %s116
          %s118 = sshll.u32 %s107, 4
          %s119 = int_to_ptr.vmem [resolvable:$true] %s118
          %121 = dma.hbm_to_vmem [thread:$0]  %s117, 128, %s119, %s104
        $region20: #{tpu_custom_call.1} parent=15 // pred_fallthru
          _
      $region16: #{tpu_custom_call.1} parent=5 // pred_fallthru
        _
      %p122 = scmp.le.s32.totalorder 1, %s13
      %p123 = scmp.lt.s32.totalorder %s13, 3
      %p124 = pnand %p122, %p123
      %p125 = pneg %p124
      // Predicated region
      $region21: #{tpu_custom_call.1} parent=5 // pred_check
        _
      $region22: #{tpu_custom_call.1} parent=5 // pred_check_branch
        %127 = sbr.rel (%p124) target = $region24
      $region23: #{tpu_custom_call.1} parent=5 // pred_region
        %s128 = ssub.s32 %s13, 1
        %s129 = sand.u32 %s40, 1
        %s130 = scalar_lea.sflag [#allocation3], %s129
        %s131 = sand.u32 %s40, 1
        %s132 = smul.addr %s131, 8
        %s133 = scalar_lea.vmem [#allocation2], %s132
        // Predicated region
        $region25: #{tpu_custom_call.1} parent=23 // pred_check
          %p134 = pneg %p53
        $region26: #{tpu_custom_call.1} parent=23 // pred_check_branch
          %136 = sbr.rel (%p134) target = $region28
        $region27: #{tpu_custom_call.1} parent=23 // pred_region
          %138 = dma.done %s130, 128
        $region28: #{tpu_custom_call.1} parent=23 // pred_fallthru
          _
        %s139 = sand.u32 %s40, 1
        %s140 = scalar_lea.sflag [#allocation3], %s139
        %s141 = sand.u32 %s40, 1
        %s142 = smul.addr %s141, 8
        %s143 = scalar_lea.vmem [#allocation2], %s142
        %p144 = pneg %p53
        %p145 = pneg %p50
        %p146 = pneg %p81
        %p147 = pneg %p78
        %s148 = sand.u32 %s68, 1
        %s149 = scalar_lea.sflag [#allocation4], %s148
        %s150 = sand.u32 %s68, 1
        %s151 = smul.addr %s150, 2
        %s152 = scalar_lea.vmem [#allocation5], %s151
        %s153 = smul.u32 2, %s23
        %s154 = smul.u32 2, %s23
        %v155 = vld [vmem:[%s133] sm:$0xff]
        %157 = vst [vmem:[#allocation1] ss:$2 sm:$0xff] %v155
        %v158 = vld.sshfl [vmem:[#allocation1] sm:$0xff pattern:$0x75316420]
        %v159 = vld.sshfl [vmem:[#allocation1 + $0x8] sm:$0xff pattern:$0x75316420]
        %vm162 = vcmask 1043456
        %v163 = vsel %vm162, %v158, 0.0
        %v164 = vrot.slane %v163, 4
        %v165 = vadd.f32 %v163, %v164
        %v166 = vrot.slane %v165, 2
        %v167 = vadd.f32 %v165, %v166
        %v168 = vrot.slane %v167, 1
        %v169 = vadd.f32 %v167, %v168
        %v170 = vsel %vm162, %v159, 0.0
        %v171 = vrot.slane %v170, 4
        %v172 = vadd.f32 %v170, %v171
        %v173 = vrot.slane %v172, 2
        %v174 = vadd.f32 %v172, %v173
        %v175 = vrot.slane %v174, 1
        %v176 = vadd.f32 %v174, %v175
        %v177 = vmul.f32 %v169, 0.25
        %v178 = vmul.f32 %v176, 0.25
        %v181 = vrot.slane %v178, 7
        %vm182 = vcmask 1040384
        %v183 = vsel %vm182, %v177, %v181
        %v185 = vlaneseq
        %vm186 = vcmp.ge.s32.totalorder %v185, 0
        %vm187 = vcmp.lt.s32.totalorder %v185, 256
        %vm188 = vmand %vm186, %vm187
        %189 = vst.msk [vmem:[%s152] sm:$0x3] %vm188, %v183
        %s190 = sand.u32 %s68, 1
        %s191 = scalar_lea.sflag [#allocation4], %s190
        %s192 = sand.u32 %s68, 1
        %s193 = smul.addr %s192, 2
        %s194 = scalar_lea.vmem [#allocation5], %s193
        // Predicated region
        $region29: #{tpu_custom_call.1} parent=23 // pred_check
          %p195 = pneg %p78
        $region30: #{tpu_custom_call.1} parent=23 // pred_check_branch
          %197 = sbr.rel (%p195) target = $region32
        $region31: #{tpu_custom_call.1} parent=23 // pred_region
          %s198 = smul.u32 2, %s23
          %200 = vsyncadd %s191, 0
          %s201 = smul.addr %s22, 2
          %s202 = sadd.s32 %s198, %s201
          %s203 = scalar_lea.hbm %s1, %s202
          %s205 = sshll.u32 %s194, 4
          %s206 = int_to_ptr.vmem [resolvable:$true] %s205
          %s207 = sshll.u32 %s203, 4
          %s208 = int_to_ptr.hbm [resolvable:$true] %s207
          %210 = dma.vmem_to_hbm [thread:$0]  %s206, 32, %s208, %s191
        $region32: #{tpu_custom_call.1} parent=23 // pred_fallthru
          _
      $region24: #{tpu_custom_call.1} parent=5 // pred_fallthru
        _
      %p211 = scmp.le.s32.totalorder 2, %s13
      // Predicated region
      $region33: #{tpu_custom_call.1} parent=5 // pred_check
        %p212 = pneg %p211
      $region34: #{tpu_custom_call.1} parent=5 // pred_check_branch
        %214 = sbr.rel (%p212) target = $region36
      $region35: #{tpu_custom_call.1} parent=5 // pred_region
        %s215 = ssub.s32 %s13, 2
        // Predicated region
        $region37: #{tpu_custom_call.1} parent=35 // pred_check
          %p216 = pneg %p84
        $region38: #{tpu_custom_call.1} parent=35 // pred_check_branch
          %218 = sbr.rel (%p216) target = $region40
        $region39: #{tpu_custom_call.1} parent=35 // pred_region
          %s219 = sand.u32 %s69, 1
          %s220 = scalar_lea.sflag [#allocation4], %s219
          %s221 = sand.u32 %s69, 1
          %s222 = smul.addr %s221, 2
          %s223 = scalar_lea.vmem [#allocation5], %s222
          %225 = dma.done %s220, 32
        $region40: #{tpu_custom_call.1} parent=35 // pred_fallthru
          _
      $region36: #{tpu_custom_call.1} parent=5 // pred_fallthru
        _
    $region6: #{tpu_custom_call.1} parent=1 // loop_footer
      %s17 = sadd.s32 1, %s13
    $region7: #{tpu_custom_call.1} parent=1 // loop_footer_branch
      %12 = sbr.rel target = $region3
    $region8: #{tpu_custom_call.1} parent=1 // loop_exit
      _
    %226 = vsyncpa [#allocation3], 1
    %s227 = scalar_lea.sflag [#allocation3], 1
    %228 = vsyncpa %s227, 1
    %229 = vsyncpa [#allocation4], 1
    %s230 = scalar_lea.sflag [#allocation4], 1
    %231 = vsyncpa %s230, 1

</llo_original>
